<compile_context>
chip_gen: v5e
topology: v5e:2x2
jax: 0.10.0
libtpu: 0.0.40
codegen_flags: <defaults>
</compile_context>

<pallas_src>
import functools

import jax
import jax.numpy as jnp
from jax import lax
from jax.experimental import pallas as pl
from jax.experimental.pallas import tpu as pltpu


_CHUNK = 128  # lane width of elementwise chunks / widened accumulators


def _round_up(x, k):
    return (x + k - 1) // k * k


def _vmem_capacity_bytes():
    try:
        return int(pltpu.get_tpu_info().vmem_capacity_bytes)
    except Exception:
        return 64 << 20   # conservative fallback (v7x-sized)


def _estimate_vmem(tn, tm, d_pad, in_bytes):
    return (2 * tn * d_pad * in_bytes          # anchor blocks (double-buffered)
            + 2 * tm * d_pad * in_bytes        # bank blocks (double-buffered)
            + 2 * (tn + tm) * 4                # label blocks
            + 2 * tn * 4                       # output block
            + 2 * tn * _CHUNK * 4              # widened accumulators
            + tn * tm * 4                      # sim (dot output)
            + 6 * tn * _CHUNK * 4              # per-chunk temporaries
            + (2 << 20))                       # headroom


def _pick_tiles(n, m, d_pad, in_bytes, vmem_cap, tile_n, tile_m):
    budget = max(vmem_cap - (16 << 20), 8 << 20)
    m128 = _round_up(m, _CHUNK)
    # Bank residency: load the whole bank once (constant index_map) when it
    # fits comfortably and the unrolled chunk loop stays reasonable.  This
    # cuts HBM traffic to one bank read total (big win on v5e/v6e).
    resident = (2 * m128 * d_pad * in_bytes <= budget // 2
                and m128 // _CHUNK <= 32)
    if tile_m is not None:
        tm = tile_m
    else:
        tm = m128 if resident else (1024 if m >= 1024 else m128)
    if tile_n is not None:
        tn = tile_n
    else:
        # >= 2 anchor blocks whenever possible (both v7x TensorCores busy);
        # when the bank must be re-streamed per n-block prefer a bigger tn.
        tn_cap = 256 if resident else 512
        tn = max(8, min(tn_cap, _round_up(-(-n // 2), 8)))
    # Shrink auto-chosen tiles if they would not fit the per-core VMEM budget.
    if tile_m is None:
        while tm > _CHUNK and _estimate_vmem(tn, tm, d_pad, in_bytes) > budget:
            tm = max(_CHUNK, (tm // 2) // _CHUNK * _CHUNK)
    if tile_n is None:
        while tn > 8 and _estimate_vmem(tn, tm, d_pad, in_bytes) > budget:
            tn = max(8, _round_up(tn // 2, 8))
    return tn, tm


def _pad_to(arr, shape, fill, dtype):
    """Cast + pad; no copy is emitted when the array is already aligned."""
    arr = arr.astype(dtype)
    if tuple(arr.shape) == tuple(shape):
        return arr
    out = jnp.full(shape, fill, dtype)
    return out.at[tuple(slice(0, s) for s in arr.shape)].set(arr)


def prepare_global_bank(global_inputs, global_targets, dtype=jnp.bfloat16):
    """Pad/cast the memory bank ONCE, outside the training step.

    The returned (bank, labels) can be passed straight to global_ms_loss;
    aligned inputs are used as-is, so the per-call padded bank copy is gone.
    Padded columns carry the label sentinel -2 and are masked in-kernel.
    """
    m, d = global_inputs.shape
    m_pad = _round_up(m, _CHUNK)
    d_pad = _round_up(d, 128)
    g = _pad_to(global_inputs, (m_pad, d_pad), 0, dtype)
    gt = _pad_to(jnp.asarray(global_targets).reshape(1, -1), (1, m_pad),
                 -2, jnp.int32)
    return g, gt


def _make_ms_kernel(n_actual, tn, tm, alpha, beta, base, pos_thresh):
    """Per-(n-block, m-block) kernel; widened VMEM accumulators over m."""
    n_chunks = tm // _CHUNK

    def kernel(x_ref, g_ref, t_ref, gt_ref, out_ref, pos_acc, neg_acc):
        i = pl.program_id(0)          # anchor block ("parallel")
        k = pl.program_id(1)          # bank block  ("arbitrary", innermost)

        @pl.when(k == 0)
        def _():
            pos_acc[...] = jnp.zeros_like(pos_acc)
            neg_acc[...] = jnp.zeros_like(neg_acc)

        # sim = x @ bank_block.T -> (tn, tm); bf16 operands, f32 MXU accum.
        # NT contraction (both operands contract d) keeps the bank DMA
        # lane-dense in d, same pattern as flash-attention q.k^T.
        sim = lax.dot_general(
            x_ref[...], g_ref[...],
            dimension_numbers=(((1,), (1,)), ((), ())),
            preferred_element_type=jnp.float32,
        )

        t = t_ref[...]                 # (tn, 1) int32, -1 on padded rows
        gt = gt_ref[...]               # (1, tm) int32, -2 on padded columns

        # 128-lane column chunks; lane-aligned adds into the widened
        # accumulators (no per-step cross-lane reduction).
        for c in range(n_chunks):
            sl = slice(c * _CHUNK, (c + 1) * _CHUNK)
            s_c = sim[:, sl]                                  # (tn, 128) f32
            gt_c = gt[:, sl]                                  # (1, 128)
            same = t == gt_c                                  # (tn, 128)
            col_ok = (gt_c >= 0).astype(jnp.float32)          # sentinel mask
            # One fused exponential (each element uses exactly one exponent).
            e = jnp.exp(jnp.where(same, -beta, alpha) * (s_c - base)) * col_ok
            pos_acc[...] += jnp.where(
                jnp.logical_and(same, s_c < pos_thresh), e, 0.0)
            neg_acc[...] += jnp.where(same, 0.0, e)

        @pl.when(k == pl.num_programs(1) - 1)
        def _():
            pos_sum = jnp.sum(pos_acc[...], axis=-1, keepdims=True)   # (tn, 1)
            neg_sum = jnp.sum(neg_acc[...], axis=-1, keepdims=True)
            row = lax.broadcasted_iota(jnp.int32, (tn, 1), 0) + i * tn
            # exp > 0, so sum > 0 <=> at least one selected pair (matches the
            # reference's count check unless every term underflows f32).
            valid = jnp.logical_and(
                row < n_actual,
                jnp.logical_and(pos_sum > 0.0, neg_sum > 0.0))
            pos_loss = (2.0 / beta) * jnp.log(1.0 + pos_sum)
            neg_loss = (2.0 / alpha) * jnp.log(1.0 + neg_sum)
            out_ref[...] = jnp.where(valid, pos_loss + neg_loss, 0.0)

    return kernel


@functools.partial(jax.jit, static_argnames=("alpha", "beta", "base",
                                             "tile_n", "tile_m",
                                             "use_bf16_matmul",
                                             "self_sim_margin"))
def global_ms_loss(inputs, targets, global_inputs, global_targets,
                   alpha=10.0, beta=2.0, base=0.5,
                   tile_n=None, tile_m=None,
                   use_bf16_matmul=True, self_sim_margin=None):
    """Pallas implementation of Global_MS_m.forward (hard_mining=None).

    inputs:         (n, d) float          anchors
    targets:        (n,)   int            anchor labels
    global_inputs:  (m, d) float          memory bank (optionally pre-padded)
    global_targets: (m,) or (1, m) int    bank labels (sentinel < 0 in padding)
    returns scalar float32 loss (mean over the n anchors)
    """
    n, d = inputs.shape
    m = global_inputs.shape[0]

    mm_dtype = jnp.bfloat16 if use_bf16_matmul else jnp.float32
    in_bytes = 2 if use_bf16_matmul else 4
    if self_sim_margin is None:
        # bf16 rounding can pull a true sim==1 self-pair just below 1.0; the
        # margin keeps the reference's `pos < 1` self-filter effective.
        self_sim_margin = (1.0 / 256.0) if use_bf16_matmul else 0.0
    pos_thresh = 1.0 - float(self_sim_margin)

    d_pad = _round_up(d, 128)
    vmem_cap = _vmem_capacity_bytes()
    tn, tm = _pick_tiles(n, m, d_pad, in_bytes, vmem_cap, tile_n, tile_m)
    assert tm % _CHUNK == 0, "tile_m must be a multiple of 128"
    n_pad = _round_up(n, tn)
    m_pad = _round_up(m, tm)

    # Padding/casting is skipped when inputs are already aligned; use
    # prepare_global_bank once, outside the step, to hoist the bank copy.
    x = _pad_to(inputs, (n_pad, d_pad), 0, mm_dtype)
    g = _pad_to(global_inputs, (m_pad, d_pad), 0, mm_dtype)
    t = _pad_to(jnp.asarray(targets).reshape(-1, 1), (n_pad, 1), -1, jnp.int32)
    gt = _pad_to(jnp.asarray(global_targets).reshape(1, -1), (1, m_pad),
                 -2, jnp.int32)

    kernel = _make_ms_kernel(n, tn, tm, float(alpha), float(beta),
                             float(base), pos_thresh)

    vmem_limit = min(max(_estimate_vmem(tn, tm, d_pad, in_bytes), 16 << 20),
                     max(vmem_cap - (16 << 20), 16 << 20))

    grid_spec = pltpu.PrefetchScalarGridSpec(
        num_scalar_prefetch=0,
        grid=(n_pad // tn, m_pad // tm),
        in_specs=[
            pl.BlockSpec((tn, d_pad), lambda i, k: (i, 0)),   # anchors
            pl.BlockSpec((tm, d_pad), lambda i, k: (k, 0)),   # bank
            pl.BlockSpec((tn, 1),     lambda i, k: (i, 0)),   # anchor labels
            pl.BlockSpec((1, tm),     lambda i, k: (0, k)),   # bank labels
        ],
        out_specs=pl.BlockSpec((tn, 1), lambda i, k: (i, 0)),  # per-anchor loss
        scratch_shapes=[
            pltpu.VMEM((tn, _CHUNK), jnp.float32),   # pos exp-sum (widened)
            pltpu.VMEM((tn, _CHUNK), jnp.float32),   # neg exp-sum (widened)
        ],
    )

    per_anchor = pl.pallas_call(
        kernel,
        out_shape=jax.ShapeDtypeStruct((n_pad, 1), jnp.float32),
        grid_spec=grid_spec,
        compiler_params=pltpu.CompilerParams(
            dimension_semantics=("parallel", "arbitrary"),
            vmem_limit_bytes=int(vmem_limit),
        ),
    )(x, g, t, gt)

    return jnp.sum(per_anchor) / n


def _reference(inputs, targets, global_inputs, global_targets,
               alpha=10.0, beta=2.0, base=0.5, pos_thresh=1.0,
               mm_dtype=jnp.float32):
    """Pure-JAX reference mirroring the PyTorch loop (hard_mining=None)."""
    n = inputs.shape[0]
    sim = jnp.dot(inputs.astype(mm_dtype), global_inputs.astype(mm_dtype).T,
                  preferred_element_type=jnp.float32)
    total = 0.0
    for i in range(n):
        row = sim[i]
        same = global_targets == targets[i]
        pos = row[jnp.logical_and(same, row < pos_thresh)]
        neg = row[~same]
        if pos.size < 1 or neg.size < 1:
            continue
        pos_loss = 2.0 / beta * jnp.log(1.0 + jnp.sum(jnp.exp(-beta * (pos - base))))
        neg_loss = 2.0 / alpha * jnp.log(1.0 + jnp.sum(jnp.exp(alpha * (neg - base))))
        total = total + pos_loss + neg_loss
    return total / n


if __name__ == "__main__":
    key = jax.random.PRNGKey(0)
    num_classes = 4

    # --- test 1: tiny shapes, exact f32 path vs reference ------------------
    k1, k2, k3, k4 = jax.random.split(key, 4)
    n, m, d = 8, 32, 32
    inputs = jax.random.normal(k1, (n, d), dtype=jnp.float32)
    inputs = inputs / jnp.linalg.norm(inputs, axis=-1, keepdims=True)
    global_inputs = jax.random.normal(k2, (m, d), dtype=jnp.float32)
    global_inputs = global_inputs / jnp.linalg.norm(global_inputs, axis=-1, keepdims=True)
    targets = jax.random.randint(k3, (n,), 0, num_classes, dtype=jnp.int32)
    global_targets = jax.random.randint(k4, (m,), 0, num_classes, dtype=jnp.int32)

    loss_f32 = jax.block_until_ready(
        global_ms_loss(inputs, targets, global_inputs, global_targets,
                       use_bf16_matmul=False))
    ref_f32 = _reference(inputs, targets, global_inputs, global_targets)
    assert jnp.allclose(loss_f32, ref_f32, rtol=1e-4, atol=1e-5), (loss_f32, ref_f32)

    # --- test 2: default bf16 MXU path, pre-padded bank (hoisted cast) -----
    g_prep, gt_prep = prepare_global_bank(global_inputs, global_targets)
    loss_bf16 = jax.block_until_ready(
        global_ms_loss(inputs, targets, g_prep, gt_prep))
    ref_bf16 = _reference(inputs, targets, global_inputs, global_targets,
                          pos_thresh=1.0 - 1.0 / 256.0, mm_dtype=jnp.bfloat16)
    assert jnp.allclose(loss_bf16, ref_bf16, rtol=2e-3, atol=1e-4), (loss_bf16, ref_bf16)

    # --- test 3: multi-block grid (forced small tiles), padded n and m -----
    k5, k6, k7, k8 = jax.random.split(jax.random.PRNGKey(1), 4)
    n2, m2, d2 = 24, 300, 48
    inputs2 = jax.random.normal(k5, (n2, d2), dtype=jnp.float32)
    inputs2 = inputs2 / jnp.linalg.norm(inputs2, axis=-1, keepdims=True)
    global_inputs2 = jax.random.normal(k6, (m2, d2), dtype=jnp.float32)
    global_inputs2 = global_inputs2 / jnp.linalg.norm(global_inputs2, axis=-1, keepdims=True)
    targets2 = jax.random.randint(k7, (n2,), 0, num_classes, dtype=jnp.int32)
    global_targets2 = jax.random.randint(k8, (m2,), 0, num_classes, dtype=jnp.int32)

    loss2 = jax.block_until_ready(
        global_ms_loss(inputs2, targets2, global_inputs2, global_targets2,
                       tile_n=16, tile_m=128, use_bf16_matmul=False))
    ref2 = _reference(inputs2, targets2, global_inputs2, global_targets2)
    assert jnp.allclose(loss2, ref2, rtol=1e-4, atol=1e-5), (loss2, ref2)

    print("KERNEL_OK")
</pallas_src>

<mosaic_0001>
module attributes {stable_mosaic.version = 11 : i64} {
  func.func @kernel(%arg0: i32, %arg1: i32, %arg2: memref<8x128xf32, #tpu.memory_space<vmem>>, %arg3: memref<128x128xf32, #tpu.memory_space<vmem>>, %arg4: memref<8x1xi32, #tpu.memory_space<vmem>>, %arg5: memref<1x128xi32, #tpu.memory_space<vmem>>, %arg6: memref<8x1xf32, #tpu.memory_space<vmem>>, %arg7: memref<8x128xf32, #tpu.memory_space<vmem>>, %arg8: memref<8x128xf32, #tpu.memory_space<vmem>>) attributes {dimension_semantics = [#tpu.dimension_semantics<parallel>, #tpu.dimension_semantics<arbitrary>], iteration_bounds = array<i64: 1, 1>, scalar_prefetch = 0 : i64, scratch_operands = 2 : i64, tpu.core_type = #tpu.core_type<tc>, window_params = [{transform_indices = @transform_0, window_bounds = array<i64: 8, 128>}, {transform_indices = @transform_1, window_bounds = array<i64: 128, 128>}, {transform_indices = @transform_2, window_bounds = array<i64: 8, 1>}, {transform_indices = @transform_3, window_bounds = array<i64: 1, 128>}, {transform_indices = @transform_4, window_bounds = array<i64: 8, 1>}]} {
    %c0_i32 = arith.constant 0 : i32
    %0 = arith.cmpi eq, %arg1, %c0_i32 : i32
    %1 = arith.extui %0 : i1 to i32
    %c0_i32_0 = arith.constant 0 : i32
    %2 = arith.cmpi ne, %1, %c0_i32_0 : i32
    scf.if %2 {
      %cst_25 = arith.constant 0.000000e+00 : f32
      %40 = vector.broadcast %cst_25 : f32 to vector<8x128xf32>
      %c0_26 = arith.constant 0 : index
      %c0_27 = arith.constant 0 : index
      %41 = vector.load %arg7[%c0_26, %c0_27] : memref<8x128xf32, #tpu.memory_space<vmem>>, vector<8x128xf32>
      tpu.vector_store %arg7[%c0_26, %c0_27], %40 {strides = array<i32>} : memref<8x128xf32, #tpu.memory_space<vmem>>, vector<8x128xf32>,
      %cst_28 = arith.constant 0.000000e+00 : f32
      %42 = vector.broadcast %cst_28 : f32 to vector<8x128xf32>
      %c0_29 = arith.constant 0 : index
      %c0_30 = arith.constant 0 : index
      %43 = vector.load %arg8[%c0_29, %c0_30] : memref<8x128xf32, #tpu.memory_space<vmem>>, vector<8x128xf32>
      tpu.vector_store %arg8[%c0_29, %c0_30], %42 {strides = array<i32>} : memref<8x128xf32, #tpu.memory_space<vmem>>, vector<8x128xf32>,
    } else {
    }
    %c0 = arith.constant 0 : index
    %c0_1 = arith.constant 0 : index
    %3 = vector.load %arg2[%c0, %c0_1] : memref<8x128xf32, #tpu.memory_space<vmem>>, vector<8x128xf32>
    %c0_2 = arith.constant 0 : index
    %c0_3 = arith.constant 0 : index
    %4 = vector.load %arg3[%c0_2, %c0_3] : memref<128x128xf32, #tpu.memory_space<vmem>>, vector<128x128xf32>
    %cst = arith.constant dense<0.000000e+00> : vector<8x128xf32>
    %5 = tpu.matmul %3, %4, %cst {dimension_numbers = #tpu.dot_dimension_numbers<[1], [1], [0], [0], [0, 0, 1, 0], [], []>} : vector<8x128xf32>, vector<128x128xf32>, vector<8x128xf32> -> vector<8x128xf32>
    %c0_4 = arith.constant 0 : index
    %c0_5 = arith.constant 0 : index
    %6 = vector.load %arg4[%c0_4, %c0_5] : memref<8x1xi32, #tpu.memory_space<vmem>>, vector<8x1xi32>
    %c0_6 = arith.constant 0 : index
    %c0_7 = arith.constant 0 : index
    %7 = vector.load %arg5[%c0_6, %c0_7] : memref<1x128xi32, #tpu.memory_space<vmem>>, vector<1x128xi32>
    %8 = vector.broadcast %6 : vector<8x1xi32> to vector<8x128xi32>
    %9 = vector.broadcast %7 : vector<1x128xi32> to vector<8x128xi32>
    %10 = arith.cmpi eq, %8, %9 : vector<8x128xi32>
    %c0_i32_8 = arith.constant 0 : i32
    %11 = vector.broadcast %c0_i32_8 : i32 to vector<1x128xi32>
    %12 = arith.cmpi sge, %7, %11 : vector<1x128xi32>
    %13 = arith.extui %12 : vector<1x128xi1> to vector<1x128xi32>
    %14 = arith.sitofp %13 : vector<1x128xi32> to vector<1x128xf32>
    %cst_9 = arith.constant -2.000000e+00 : f32
    %cst_10 = arith.constant 1.000000e+01 : f32
    %15 = vector.broadcast %cst_9 : f32 to vector<8x128xf32>
    %16 = vector.broadcast %cst_10 : f32 to vector<8x128xf32>
    %17 = arith.select %10, %15, %16 : vector<8x128xi1>, vector<8x128xf32>
    %cst_11 = arith.constant 5.000000e-01 : f32
    %18 = vector.broadcast %cst_11 : f32 to vector<8x128xf32>
    %19 = arith.subf %5, %18 : vector<8x128xf32>
    %20 = arith.mulf %17, %19 : vector<8x128xf32>
    %21 = math.exp %20 : vector<8x128xf32>
    %22 = vector.broadcast %14 : vector<1x128xf32> to vector<8x128xf32>
    %23 = arith.mulf %21, %22 : vector<8x128xf32>
    %c0_12 = arith.constant 0 : index
    %c0_13 = arith.constant 0 : index
    %24 = vector.load %arg7[%c0_12, %c0_13] : memref<8x128xf32, #tpu.memory_space<vmem>>, vector<8x128xf32>
    %cst_14 = arith.constant 1.000000e+00 : f32
    %25 = vector.broadcast %cst_14 : f32 to vector<8x128xf32>
    %26 = arith.cmpf olt, %5, %25 : vector<8x128xf32>
    %27 = arith.andi %10, %26 : vector<8x128xi1>
    %cst_15 = arith.constant 0.000000e+00 : f32
    %28 = vector.broadcast %cst_15 : f32 to vector<8x128xf32>
    %29 = arith.select %27, %23, %28 : vector<8x128xi1>, vector<8x128xf32>
    %30 = arith.addf %24, %29 : vector<8x128xf32>
    %c0_16 = arith.constant 0 : index
    %c0_17 = arith.constant 0 : index
    %31 = vector.load %arg7[%c0_16, %c0_17] : memref<8x128xf32, #tpu.memory_space<vmem>>, vector<8x128xf32>
    tpu.vector_store %arg7[%c0_16, %c0_17], %30 {strides = array<i32>} : memref<8x128xf32, #tpu.memory_space<vmem>>, vector<8x128xf32>,
    %c0_18 = arith.constant 0 : index
    %c0_19 = arith.constant 0 : index
    %32 = vector.load %arg8[%c0_18, %c0_19] : memref<8x128xf32, #tpu.memory_space<vmem>>, vector<8x128xf32>
    %cst_20 = arith.constant 0.000000e+00 : f32
    %33 = vector.broadcast %cst_20 : f32 to vector<8x128xf32>
    %34 = arith.select %10, %33, %23 : vector<8x128xi1>, vector<8x128xf32>
    %35 = arith.addf %32, %34 : vector<8x128xf32>
    %c0_21 = arith.constant 0 : index
    %c0_22 = arith.constant 0 : index
    %36 = vector.load %arg8[%c0_21, %c0_22] : memref<8x128xf32, #tpu.memory_space<vmem>>, vector<8x128xf32>
    tpu.vector_store %arg8[%c0_21, %c0_22], %35 {strides = array<i32>} : memref<8x128xf32, #tpu.memory_space<vmem>>, vector<8x128xf32>,
    %c0_i32_23 = arith.constant 0 : i32
    %37 = arith.cmpi eq, %arg1, %c0_i32_23 : i32
    %38 = arith.extui %37 : i1 to i32
    %c0_i32_24 = arith.constant 0 : i32
    %39 = arith.cmpi ne, %38, %c0_i32_24 : i32
    scf.if %39 {
      %c0_25 = arith.constant 0 : index
      %c0_26 = arith.constant 0 : index
      %40 = vector.load %arg7[%c0_25, %c0_26] : memref<8x128xf32, #tpu.memory_space<vmem>>, vector<8x128xf32>
      %cst_27 = arith.constant dense<0.000000e+00> : vector<8xf32>
      %41 = vector.multi_reduction <add>, %40, %cst_27 [1] : vector<8x128xf32> to vector<8xf32>
      %42 = vector.shape_cast %41 : vector<8xf32> to vector<8x1xf32>
      %c0_28 = arith.constant 0 : index
      %c0_29 = arith.constant 0 : index
      %43 = vector.load %arg8[%c0_28, %c0_29] : memref<8x128xf32, #tpu.memory_space<vmem>>, vector<8x128xf32>
      %cst_30 = arith.constant dense<0.000000e+00> : vector<8xf32>
      %44 = vector.multi_reduction <add>, %43, %cst_30 [1] : vector<8x128xf32> to vector<8xf32>
      %45 = vector.shape_cast %44 : vector<8xf32> to vector<8x1xf32>
      %46 = tpu.iota {dimensions = array<i32: 0>} : vector<8x1xi32>
      %c8_i32 = arith.constant 8 : i32
      %47 = arith.muli %arg0, %c8_i32 : i32
      %48 = vector.broadcast %47 : i32 to vector<8x1xi32>
      %49 = arith.addi %46, %48 : vector<8x1xi32>
      %c8_i32_31 = arith.constant 8 : i32
      %50 = vector.broadcast %c8_i32_31 : i32 to vector<8x1xi32>
      %51 = arith.cmpi slt, %49, %50 : vector<8x1xi32>
      %cst_32 = arith.constant 0.000000e+00 : f32
      %52 = vector.broadcast %cst_32 : f32 to vector<8x1xf32>
      %53 = arith.cmpf ogt, %42, %52 : vector<8x1xf32>
      %cst_33 = arith.constant 0.000000e+00 : f32
      %54 = vector.broadcast %cst_33 : f32 to vector<8x1xf32>
      %55 = arith.cmpf ogt, %45, %54 : vector<8x1xf32>
      %56 = arith.andi %53, %55 : vector<8x1xi1>
      %57 = arith.andi %51, %56 : vector<8x1xi1>
      %cst_34 = arith.constant 1.000000e+00 : f32
      %58 = vector.broadcast %cst_34 : f32 to vector<8x1xf32>
      %59 = arith.addf %58, %42 : vector<8x1xf32>
      %60 = math.log %59 : vector<8x1xf32>
      %cst_35 = arith.constant 1.000000e+00 : f32
      %61 = vector.broadcast %cst_35 : f32 to vector<8x1xf32>
      %62 = arith.mulf %61, %60 : vector<8x1xf32>
      %cst_36 = arith.constant 1.000000e+00 : f32
      %63 = vector.broadcast %cst_36 : f32 to vector<8x1xf32>
      %64 = arith.addf %63, %45 : vector<8x1xf32>
      %65 = math.log %64 : vector<8x1xf32>
      %cst_37 = arith.constant 2.000000e-01 : f32
      %66 = vector.broadcast %cst_37 : f32 to vector<8x1xf32>
      %67 = arith.mulf %66, %65 : vector<8x1xf32>
      %68 = arith.addf %62, %67 : vector<8x1xf32>
      %cst_38 = arith.constant 0.000000e+00 : f32
      %69 = vector.broadcast %cst_38 : f32 to vector<8x1xf32>
      %70 = arith.select %57, %68, %69 : vector<8x1xi1>, vector<8x1xf32>
      %c0_39 = arith.constant 0 : index
      %c0_40 = arith.constant 0 : index
      %71 = vector.load %arg6[%c0_39, %c0_40] : memref<8x1xf32, #tpu.memory_space<vmem>>, vector<8x1xf32>
      tpu.vector_store %arg6[%c0_39, %c0_40], %70 {strides = array<i32>} : memref<8x1xf32, #tpu.memory_space<vmem>>, vector<8x1xf32>,
    } else {
    }
    return
  }
  func.func @transform_0(%arg0: i32, %arg1: i32) -> (i32, i32) {
    %c0_i32 = arith.constant 0 : i32
    %c0_i32_0 = arith.constant 0 : i32
    return %arg0, %c0_i32 : i32, i32
  }
  func.func @transform_1(%arg0: i32, %arg1: i32) -> (i32, i32) {
    %c0_i32 = arith.constant 0 : i32
    %c0_i32_0 = arith.constant 0 : i32
    return %arg1, %c0_i32 : i32, i32
  }
  func.func @transform_2(%arg0: i32, %arg1: i32) -> (i32, i32) {
    %c0_i32 = arith.constant 0 : i32
    %c0_i32_0 = arith.constant 0 : i32
    return %arg0, %c0_i32 : i32, i32
  }
  func.func @transform_3(%arg0: i32, %arg1: i32) -> (i32, i32) {
    %c0_i32 = arith.constant 0 : i32
    %c0_i32_0 = arith.constant 0 : i32
    return %c0_i32, %arg1 : i32, i32
  }
  func.func @transform_4(%arg0: i32, %arg1: i32) -> (i32, i32) {
    %c0_i32 = arith.constant 0 : i32
    %c0_i32_0 = arith.constant 0 : i32
    return %arg0, %c0_i32 : i32, i32
  }
}

</mosaic_0001>

<llo_original>
// kernel: global_ms_loss.1
$region0: #{global_ms_loss.1}
  #allocation0 [shape = 'u32[]', space=smem, size = 0x4, offset = 0x4, fixed_abs, tag = 'smem constant byte address 0x4 - core index']
  #allocation1 [shape = 'u32[72,128]{1,0:T(1,128)}', space=vmem, size = 0x9000, scoped, tag = 'internal scratch']
  #allocation2 [shape = 'f32[8,128]{1,0:T(8,128)}', space=vmem, size = 0x1000, scoped, tag = 'scratch operand']
  #allocation3 [shape = 'f32[8,128]{1,0:T(8,128)}', space=vmem, size = 0x1000, scoped, tag = 'scratch operand']
  %s0 = inlined_call_operand.vmem [shape: f32[8,128], index: 0, kind: input, shape index: {}]
  %s1 = inlined_call_operand.vmem [shape: f32[128,128], index: 1, kind: input, shape index: {}]
  %s2 = inlined_call_operand.vmem [shape: s32[8,1], index: 2, kind: input, shape index: {}]
  %s3 = inlined_call_operand.vmem [shape: s32[1,128], index: 3, kind: input, shape index: {}]
  %s4 = inlined_call_operand.vmem [shape: f32[8,1], index: 4, kind: output, shape index: {}]
  %s5 = sld [smem:[#allocation0]]
  $region34: #{global_ms_loss.1} parent=0
    _
  %s7 = ssub.s32 1, %s5
  %s8 = scalar_select 0, %s7, %s5
  // Predicated region
  $region2: #{global_ms_loss.1} parent=0 // pred_check
    _
  $region3: #{global_ms_loss.1} parent=0 // pred_check_branch
    %10 = sbr.rel (0) target = $region5
  $region4: #{global_ms_loss.1} parent=0 // pred_region
    _
  $region5: #{global_ms_loss.1} parent=0 // pred_fallthru
    _
  // Predicated region
  $region6: #{global_ms_loss.1} parent=0 // pred_check
    _
  $region7: #{global_ms_loss.1} parent=0 // pred_check_branch
    %12 = sbr.rel (0) target = $region9
  $region8: #{global_ms_loss.1} parent=0 // pred_region
    _
  $region9: #{global_ms_loss.1} parent=0 // pred_fallthru
    _
  // Predicated region
  $region10: #{global_ms_loss.1} parent=0 // pred_check
    _
  $region11: #{global_ms_loss.1} parent=0 // pred_check_branch
    %14 = sbr.rel (0) target = $region13
  $region12: #{global_ms_loss.1} parent=0 // pred_region
    _
  $region13: #{global_ms_loss.1} parent=0 // pred_fallthru
    _
  // Predicated region
  $region14: #{global_ms_loss.1} parent=0 // pred_check
    _
  $region15: #{global_ms_loss.1} parent=0 // pred_check_branch
    %16 = sbr.rel (0) target = $region17
  $region16: #{global_ms_loss.1} parent=0 // pred_region
    _
  $region17: #{global_ms_loss.1} parent=0 // pred_fallthru
    _
  %p17 = scmp.eq.s32.totalorder 0, 0
  // Predicated region
  $region18: #{global_ms_loss.1} parent=0 // pred_check
    %p18 = pneg %p17
  $region19: #{global_ms_loss.1} parent=0 // pred_check_branch
    %20 = sbr.rel (%p18) target = $region21
  $region20: #{global_ms_loss.1} parent=0 // pred_region
    %21 = vst [vmem:[#allocation2] sm:$0xff] 0.0
    %22 = vst [vmem:[#allocation3] sm:$0xff] 0.0
  $region21: #{global_ms_loss.1} parent=0 // pred_fallthru
    _
  %v23 = vld [vmem:[%s0] sm:$0xff]
  %v24 = vld [vmem:[%s1] sm:$0xff]
  %v25 = vld [vmem:[%s1 + $0x8] sm:$0xff]
  %v26 = vld [vmem:[%s1 + $0x10] sm:$0xff]
  %v27 = vld [vmem:[%s1 + $0x18] sm:$0xff]
  %v28 = vld [vmem:[%s1 + $0x20] sm:$0xff]
  %v29 = vld [vmem:[%s1 + $0x28] sm:$0xff]
  %v30 = vld [vmem:[%s1 + $0x30] sm:$0xff]
  %v31 = vld [vmem:[%s1 + $0x38] sm:$0xff]
  %v32 = vld [vmem:[%s1 + $0x40] sm:$0xff]
  %v33 = vld [vmem:[%s1 + $0x48] sm:$0xff]
  %v34 = vld [vmem:[%s1 + $0x50] sm:$0xff]
  %v35 = vld [vmem:[%s1 + $0x58] sm:$0xff]
  %v36 = vld [vmem:[%s1 + $0x60] sm:$0xff]
  %v37 = vld [vmem:[%s1 + $0x68] sm:$0xff]
  %v38 = vld [vmem:[%s1 + $0x70] sm:$0xff]
  %v39 = vld [vmem:[%s1 + $0x78] sm:$0xff]
  %40 = vmatpush.xpose.msra.mxu0 %v39
  %41 = vmatpush.xpose.msra.mxu0 %v38
  %42 = vmatpush.xpose.msra.mxu0 %v37
  %43 = vmatpush.xpose.msra.mxu0 %v36
  %44 = vmatpush.xpose.msra.mxu0 %v35
  %45 = vmatpush.xpose.msra.mxu0 %v34
  %46 = vmatpush.xpose.msra.mxu0 %v33
  %47 = vmatpush.xpose.msra.mxu0 %v32
  %48 = vmatpush.xpose.msra.mxu0 %v31
  %49 = vmatpush.xpose.msra.mxu0 %v30
  %50 = vmatpush.xpose.msra.mxu0 %v29
  %51 = vmatpush.xpose.msra.mxu0 %v28
  %52 = vmatpush.xpose.msra.mxu0 %v27
  %53 = vmatpush.xpose.msra.mxu0 %v26
  %54 = vmatpush.xpose.msra.mxu0 %v25
  %55 = vmatpush.xpose.msra.mxu0 %v24
  %56 = vmatmul.f32.gmra.mxu0 %v23
  %v57 = vpop.f32.mrf.mxu0
  %v58 = vadd.f32 0.0, %v57
  %59 = vdwg.mxu0
  %v60 = vld [vmem:[%s2] sm:$0xff]
  %v61 = vld [vmem:[%s3] sm:$0x1]
  %62 = vset.pattern.permute.xlu0 0
  %63 = vperm.xlu0 %62, %v60
  %v64 = vpop.permute.xlu0 %63
  %v65 = vperm.slane %v61, 0
  %vm66 = vcmp.eq.s32.totalorder %v64, %v65
  %vm67 = vcmp.ge.s32.totalorder %v61, 0
  %v68 = vsel %vm67, 1, 0
  %v69 = vcvt.s32.f32 %v68
  %v70 = vsel %vm66, -2.0, 10.0
  %v71 = vsub.f32 %v58, 0.5
  %v72 = vmul.f32 %v70, %v71
  %v73 = vmul.f32 %v72, 1.442695
  %v74 = vpow.pop %v73
  %v76 = vperm.slane %v69, 0
  %v78 = vmul.f32 %v74, %v76
  %v79 = vld [vmem:[#allocation2] sm:$0xff]
  %vm80 = vcmp.lt.f32.partialorder %v58, 1.0
  %vm81 = vmand %vm66, %vm80
  %v82 = vsel %vm81, %v78, 0.0
  %v83 = vadd.f32 %v79, %v82
  %84 = vst [vmem:[#allocation2] sm:$0xff] %v83
  %v85 = vld [vmem:[#allocation3] sm:$0xff]
  %v86 = vsel %vm66, 0.0, %v78
  %v87 = vadd.f32 %v85, %v86
  %88 = vst [vmem:[#allocation3] sm:$0xff] %v87
  // Predicated region
  $region22: #{global_ms_loss.1} parent=0 // pred_check
    %p89 = pneg %p17
  $region23: #{global_ms_loss.1} parent=0 // pred_check_branch
    %91 = sbr.rel (%p89) target = $region25
  $region24: #{global_ms_loss.1} parent=0 // pred_region
    %v92 = vld [vmem:[#allocation2] sm:$0xff]
    %93 = vadd.xlane.f32.xlu0 %v92
    %v94 = vpop.xlane.xlu0 %93
    %v95 = vld [vmem:[#allocation3] sm:$0xff]
    %96 = vadd.xlane.f32.xlu0 %v95
    %v97 = vpop.xlane.xlu0 %96
    %v98 = vlaneseq
    %v99 = vshrl.u32 %v98, 7
    %s100 = smul.u32 0, 8
    %v101 = vstv %s100
    %v102 = vadd.s32 %v99, %v101
    %vm103 = vcmp.lt.s32.totalorder %v102, 8
    %vm104 = vcmp.gt.f32.partialorder %v94, 0.0
    %vm105 = vcmp.gt.f32.partialorder %v97, 0.0
    %vm106 = vmand %vm104, %vm105
    %vm107 = vmand %vm103, %vm106
    %v108 = vadd.f32 %v94, 1.0
    %v109 = vlog2.pop %v108
    %v110 = vmul.f32 %v109, 0.6931472
    %v111 = vadd.f32 %v97, 1.0
    %v112 = vlog2.pop %v111
    %v113 = vmul.f32 %v112, 0.6931472
    %v114 = vmul.f32 %v113, 0.2
    %v115 = vadd.f32 %v110, %v114
    %v116 = vsel %vm107, %v115, 0.0
    %vm117 = vcmask 7168
    %118 = vst.msk [vmem:[%s4] sm:$0xff] %vm117, %v116
  $region25: #{global_ms_loss.1} parent=0 // pred_fallthru
    _
  // Predicated region
  $region26: #{global_ms_loss.1} parent=0 // pred_check
    _
  $region27: #{global_ms_loss.1} parent=0 // pred_check_branch
    %120 = sbr.rel (0) target = $region29
  $region28: #{global_ms_loss.1} parent=0 // pred_region
    _
  $region29: #{global_ms_loss.1} parent=0 // pred_fallthru
    _
  // Predicated region
  $region30: #{global_ms_loss.1} parent=0 // pred_check
    _
  $region31: #{global_ms_loss.1} parent=0 // pred_check_branch
    %122 = sbr.rel (0) target = $region33
  $region32: #{global_ms_loss.1} parent=0 // pred_region
    _
  $region33: #{global_ms_loss.1} parent=0 // pred_fallthru
    _

</llo_original>
